<compile_context>
chip_gen: v5e
topology: v5e:2x2
jax: 0.10.0
libtpu: 0.0.40
codegen_flags: <defaults>
</compile_context>

<pallas_src>
import functools

import jax
import jax.numpy as jnp
from jax import lax
from jax.experimental import pallas as pl
from jax.experimental.pallas import tpu as pltpu


def _attention_kernel(x_ref, wqkv_ref, wo_ref, bo_ref, o_ref, kv_ref, acc_ref,
                      *, dim_head, heads_per_step, q_tile, compute_dtype):
    qi = pl.program_id(1)          # query-tile index
    hg = pl.program_id(2)          # head-group index (reduction axis)
    g = heads_per_step
    gdh = g * dim_head

    wqkv = wqkv_ref[hg]            # [D, 3*g*dh]  (resident, compute_dtype)

    # --- K/V projection: computed once per (batch, head-group), cached in VMEM ---
    @pl.when(qi == 0)
    def _():
        kv = jnp.dot(x_ref[0], wqkv[:, gdh:],
                     preferred_element_type=jnp.float32)          # [N, 2*g*dh]
        kv_ref[hg] = kv.astype(compute_dtype)

    # --- init the f32 accumulator with the output-projection bias ---
    @pl.when(hg == 0)
    def _():
        acc_ref[...] = jnp.broadcast_to(
            bo_ref[...].astype(jnp.float32), acc_ref.shape)

    # Query rows sliced from the already-resident full-sequence x block.
    q_start = pl.multiple_of(qi * q_tile, q_tile)
    xq = x_ref[0, pl.ds(q_start, q_tile), :]                       # [tq, D]

    # Q projection for this head group (softmax scale folded into the weights).
    q = jnp.dot(xq, wqkv[:, :gdh],
                preferred_element_type=jnp.float32).astype(compute_dtype)  # [tq, g*dh]

    kv = kv_ref[hg]                                                # [N, 2*g*dh]
    k = kv[:, :gdh]
    v = kv[:, gdh:]

    # Per-head attention (static unroll over the g heads in this group).
    head_outs = []
    for j in range(g):
        sl = slice(j * dim_head, (j + 1) * dim_head)
        # q . k^T via dot_general (contraction on dh) - no XLU transpose of k.
        dots = lax.dot_general(q[:, sl], k[:, sl],
                               dimension_numbers=(((1,), (1,)), ((), ())),
                               preferred_element_type=jnp.float32)  # [tq, N]
        # Numerically-stable softmax in f32; denominator reciprocal on the EUP.
        dots = dots - jnp.max(dots, axis=-1, keepdims=True)
        p = jnp.exp(dots)
        attn = p * pl.reciprocal(jnp.sum(p, axis=-1, keepdims=True), approx=True)
        head_outs.append(jnp.dot(attn.astype(compute_dtype), v[:, sl],
                                 preferred_element_type=jnp.float32))  # [tq, dh]

    head_out = jnp.concatenate(head_outs, axis=-1).astype(compute_dtype)  # [tq, g*dh]

    # This head-group's contribution to the output projection.
    acc_ref[...] += jnp.dot(head_out, wo_ref[hg],
                            preferred_element_type=jnp.float32)    # [tq, D]

    @pl.when(hg == pl.num_programs(2) - 1)
    def _():
        o_ref[0] = acc_ref[...].astype(o_ref.dtype)


def attention_forward(x, w_qkv, w_out, b_out, *, heads, dim_head,
                      q_tile=128, heads_per_step=None,
                      compute_dtype=jnp.bfloat16,
                      vmem_limit_bytes=64 * 1024 * 1024):
    """x: [B, N, D], w_qkv: [3*inner, D], w_out: [D, inner], b_out: [D]."""
    B, N, D = x.shape
    inner = heads * dim_head
    assert w_qkv.shape == (3 * inner, D)
    assert w_out.shape == (D, inner)
    assert b_out.shape == (D,)

    # Query tile: caps the [tq, N] score matrix in VMEM.
    tq = min(q_tile, N)
    assert N % tq == 0, "sequence length must be divisible by the query tile"
    nq = N // tq

    # Heads fused per grid step: largest divisor of `heads` with g*dh <= 256
    # (fills the v6e/v7x 256-wide MXU; pass heads_per_step=2 for dh=64 on v5e).
    if heads_per_step is None:
        heads_per_step = 1
        for cand in range(1, heads + 1):
            if heads % cand == 0 and cand * dim_head <= 256:
                heads_per_step = cand
    g = heads_per_step
    assert heads % g == 0
    n_hg = heads // g
    gdh = g * dim_head

    # --- Pack + pre-transpose weights once in the wrapper (host-side, free) ---
    scale = float(dim_head) ** -0.5
    wq, wk, wv = jnp.split(w_qkv, 3, axis=0)         # each [inner, D]
    wq = wq * scale                                   # fold softmax scale (no qkv bias)

    def group(w):                                     # [inner, D] -> [n_hg, D, g*dh]
        return w.reshape(n_hg, gdh, D).transpose(0, 2, 1)

    wqkv_packed = jnp.concatenate([group(wq), group(wk), group(wv)],
                                  axis=-1).astype(compute_dtype)   # [n_hg, D, 3*g*dh]
    wo_packed = (w_out.reshape(D, n_hg, gdh)
                 .transpose(1, 2, 0).astype(compute_dtype))        # [n_hg, g*dh, D]
    bo = b_out.reshape(1, D).astype(jnp.float32)
    x_c = x.astype(compute_dtype)                                  # pre-cast once

    kernel = functools.partial(_attention_kernel,
                               dim_head=dim_head, heads_per_step=g,
                               q_tile=tq, compute_dtype=compute_dtype)

    grid = (B, nq, n_hg)   # head-group axis last: reduction/accumulation axis

    return pl.pallas_call(
        kernel,
        out_shape=jax.ShapeDtypeStruct((B, N, D), x.dtype),
        grid_spec=pltpu.PrefetchScalarGridSpec(
            num_scalar_prefetch=0,
            grid=grid,
            in_specs=[
                # full-sequence x block; constant index within a batch -> the
                # copy is elided across qi / head-group steps.
                pl.BlockSpec((1, N, D), lambda b, qi, hg: (b, 0, 0)),
                # weight slabs fully resident: full-array block, constant index
                # -> DMA'd from HBM exactly once.
                pl.BlockSpec((n_hg, D, 3 * gdh), lambda b, qi, hg: (0, 0, 0)),
                pl.BlockSpec((n_hg, gdh, D), lambda b, qi, hg: (0, 0, 0)),
                pl.BlockSpec((1, D), lambda b, qi, hg: (0, 0)),       # bias
            ],
            out_specs=pl.BlockSpec((1, tq, D), lambda b, qi, hg: (b, qi, 0)),
            scratch_shapes=[
                pltpu.VMEM((n_hg, N, 2 * gdh), compute_dtype),  # K/V cache
                pltpu.VMEM((tq, D), jnp.float32),               # f32 accumulator
            ],
        ),
        compiler_params=pltpu.CompilerParams(
            # qi carries the K/V cache (filled at qi==0), so it must stay
            # un-partitioned ("arbitrary"); only the batch axis is parallel.
            dimension_semantics=("parallel", "arbitrary", "arbitrary"),
            vmem_limit_bytes=vmem_limit_bytes),
    )(x_c, wqkv_packed, wo_packed, bo)


def attention_reference(x, w_qkv, w_out, b_out, *, heads, dim_head):
    """Plain-JAX reference mirroring the PyTorch forward."""
    B, N, D = x.shape
    inner = heads * dim_head
    qkv = jnp.einsum("bnd,ed->bne", x, w_qkv)           # [B, N, 3*inner]
    q, k, v = jnp.split(qkv, 3, axis=-1)

    def split_heads(t):
        return t.reshape(B, N, heads, dim_head).transpose(0, 2, 1, 3)

    q, k, v = map(split_heads, (q, k, v))
    dots = jnp.einsum("bhnd,bhmd->bhnm", q, k) * (dim_head ** -0.5)
    attn = jax.nn.softmax(dots, axis=-1)
    out = jnp.einsum("bhnm,bhmd->bhnd", attn, v)
    out = out.transpose(0, 2, 1, 3).reshape(B, N, inner)
    return jnp.einsum("bni,di->bnd", out, w_out) + b_out


if __name__ == "__main__":
    # Small shapes consistent with the module (project_out=True branch).
    B, N, dim = 2, 8, 32
    heads, dim_head = 4, 16
    inner = heads * dim_head

    key = jax.random.PRNGKey(0)
    kx, kqkv, kwo, kbo = jax.random.split(key, 4)

    x = jax.random.normal(kx, (B, N, dim), dtype=jnp.float32)
    # Deterministic parameter init (uniform, PyTorch-Linear-like scaling).
    w_qkv = jax.random.uniform(kqkv, (3 * inner, dim), dtype=jnp.float32,
                               minval=-dim ** -0.5, maxval=dim ** -0.5)
    w_out = jax.random.uniform(kwo, (dim, inner), dtype=jnp.float32,
                               minval=-inner ** -0.5, maxval=inner ** -0.5)
    b_out = jax.random.uniform(kbo, (dim,), dtype=jnp.float32,
                               minval=-inner ** -0.5, maxval=inner ** -0.5)

    ref = attention_reference(x, w_qkv, w_out, b_out,
                              heads=heads, dim_head=dim_head)

    # f32 MXU operands: tight tolerance (approx reciprocal error ~1e-4 rel).
    out_f32 = attention_forward(x, w_qkv, w_out, b_out,
                                heads=heads, dim_head=dim_head,
                                compute_dtype=jnp.float32)
    out_f32 = jax.block_until_ready(out_f32)
    assert out_f32.shape == (B, N, dim)
    assert jnp.allclose(out_f32, ref, atol=2e-3, rtol=2e-3), \
        "mismatch vs reference (f32)"

    # Default path: bf16 MXU operands with f32 softmax / f32 accumulation.
    out_bf16 = attention_forward(x, w_qkv, w_out, b_out,
                                 heads=heads, dim_head=dim_head)
    out_bf16 = jax.block_until_ready(out_bf16)
    assert out_bf16.shape == (B, N, dim)
    assert float(jnp.max(jnp.abs(out_bf16 - ref))) < 0.1, \
        "mismatch vs reference (bf16)"

    print("KERNEL_OK")
</pallas_src>

<mosaic_0001>
module attributes {stable_mosaic.version = 11 : i64} {
  func.func @_attention_kernel(%arg0: i32, %arg1: i32, %arg2: i32, %arg3: memref<1x8x32xf32, #tpu.memory_space<vmem>>, %arg4: memref<1x32x192xf32, #tpu.memory_space<vmem>>, %arg5: memref<1x64x32xf32, #tpu.memory_space<vmem>>, %arg6: memref<1x32xf32, #tpu.memory_space<vmem>>, %arg7: memref<1x8x32xf32, #tpu.memory_space<vmem>>, %arg8: memref<1x8x128xf32, #tpu.memory_space<vmem>>, %arg9: memref<8x32xf32, #tpu.memory_space<vmem>>) attributes {dimension_semantics = [#tpu.dimension_semantics<parallel>, #tpu.dimension_semantics<arbitrary>, #tpu.dimension_semantics<arbitrary>], iteration_bounds = array<i64: 2, 1, 1>, scalar_prefetch = 0 : i64, scratch_operands = 2 : i64, tpu.core_type = #tpu.core_type<tc>, window_params = [{transform_indices = @transform_0, window_bounds = array<i64: 1, 8, 32>}, {pipeline_mode = #tpu.pipeline_mode<synchronous>, transform_indices = @transform_1, window_bounds = array<i64: 1, 32, 192>}, {pipeline_mode = #tpu.pipeline_mode<synchronous>, transform_indices = @transform_2, window_bounds = array<i64: 1, 64, 32>}, {pipeline_mode = #tpu.pipeline_mode<synchronous>, transform_indices = @transform_3, window_bounds = array<i64: 1, 32>}, {transform_indices = @transform_4, window_bounds = array<i64: 1, 8, 32>}]} {
    %0 = arith.index_cast %arg2 : i32 to index
    %c0 = arith.constant 0 : index
    %c0_0 = arith.constant 0 : index
    %1 = vector.load %arg4[%0, %c0, %c0_0] : memref<1x32x192xf32, #tpu.memory_space<vmem>>, vector<1x32x192xf32>
    %2 = vector.shape_cast %1 : vector<1x32x192xf32> to vector<32x192xf32>
    %c0_i32 = arith.constant 0 : i32
    %3 = arith.cmpi eq, %arg1, %c0_i32 : i32
    %4 = arith.extui %3 : i1 to i32
    %c0_i32_1 = arith.constant 0 : i32
    %5 = arith.cmpi ne, %4, %c0_i32_1 : i32
    scf.if %5 {
      %c0_33 = arith.constant 0 : index
      %c0_34 = arith.constant 0 : index
      %c0_35 = arith.constant 0 : index
      %92 = vector.load %arg3[%c0_33, %c0_34, %c0_35] : memref<1x8x32xf32, #tpu.memory_space<vmem>>, vector<1x8x32xf32>
      %93 = vector.shape_cast %92 : vector<1x8x32xf32> to vector<8x32xf32>
      %94 = vector.extract_strided_slice %2 {offsets = [0, 64], sizes = [32, 128], strides = [1, 1]} : vector<32x192xf32> to vector<32x128xf32>
      %cst_36 = arith.constant dense<0.000000e+00> : vector<8x128xf32>
      %95 = tpu.matmul %93, %94, %cst_36 {dimension_numbers = #tpu.dot_dimension_numbers<[1], [0], [0], [1], [0, 0, 1, 1], [], []>} : vector<8x32xf32>, vector<32x128xf32>, vector<8x128xf32> -> vector<8x128xf32>
      %96 = arith.index_cast %arg2 : i32 to index
      %c0_37 = arith.constant 0 : index
      %c0_38 = arith.constant 0 : index
      %97 = vector.load %arg8[%96, %c0_37, %c0_38] : memref<1x8x128xf32, #tpu.memory_space<vmem>>, vector<1x8x128xf32>
      %98 = vector.shape_cast %97 : vector<1x8x128xf32> to vector<8x128xf32>
      %99 = vector.shape_cast %95 : vector<8x128xf32> to vector<1x8x128xf32>
      tpu.vector_store %arg8[%96, %c0_37, %c0_38], %99 {strides = array<i32>} : memref<1x8x128xf32, #tpu.memory_space<vmem>>, vector<1x8x128xf32>,
    } else {
    }
    %c0_i32_2 = arith.constant 0 : i32
    %6 = arith.cmpi eq, %arg2, %c0_i32_2 : i32
    %7 = arith.extui %6 : i1 to i32
    %c0_i32_3 = arith.constant 0 : i32
    %8 = arith.cmpi ne, %7, %c0_i32_3 : i32
    scf.if %8 {
      %c0_33 = arith.constant 0 : index
      %c0_34 = arith.constant 0 : index
      %92 = vector.load %arg6[%c0_33, %c0_34] : memref<1x32xf32, #tpu.memory_space<vmem>>, vector<1x32xf32>
      %93 = vector.shape_cast %92 : vector<1x32xf32> to vector<1x32xf32>
      %94 = vector.broadcast %93 : vector<1x32xf32> to vector<8x32xf32>
      %c0_35 = arith.constant 0 : index
      %c0_36 = arith.constant 0 : index
      %95 = vector.load %arg9[%c0_35, %c0_36] : memref<8x32xf32, #tpu.memory_space<vmem>>, vector<8x32xf32>
      tpu.vector_store %arg9[%c0_35, %c0_36], %94 {strides = array<i32>} : memref<8x32xf32, #tpu.memory_space<vmem>>, vector<8x32xf32>,
    } else {
    }
    %c8_i32 = arith.constant 8 : i32
    %9 = arith.muli %arg1, %c8_i32 : i32
    %10 = tpu.assume_multiple %9, 8 : i32
    %c0_4 = arith.constant 0 : index
    %11 = arith.index_cast %10 : i32 to index
    %c0_5 = arith.constant 0 : index
    %12 = vector.load %arg3[%c0_4, %11, %c0_5] : memref<1x8x32xf32, #tpu.memory_space<vmem>>, vector<1x8x32xf32>
    %13 = vector.shape_cast %12 : vector<1x8x32xf32> to vector<8x32xf32>
    %14 = vector.extract_strided_slice %2 {offsets = [0, 0], sizes = [32, 64], strides = [1, 1]} : vector<32x192xf32> to vector<32x64xf32>
    %cst = arith.constant dense<0.000000e+00> : vector<8x64xf32>
    %15 = tpu.matmul %13, %14, %cst {dimension_numbers = #tpu.dot_dimension_numbers<[1], [0], [0], [1], [0, 0, 1, 1], [], []>} : vector<8x32xf32>, vector<32x64xf32>, vector<8x64xf32> -> vector<8x64xf32>
    %16 = arith.index_cast %arg2 : i32 to index
    %c0_6 = arith.constant 0 : index
    %c0_7 = arith.constant 0 : index
    %17 = vector.load %arg8[%16, %c0_6, %c0_7] : memref<1x8x128xf32, #tpu.memory_space<vmem>>, vector<1x8x128xf32>
    %18 = vector.shape_cast %17 : vector<1x8x128xf32> to vector<8x128xf32>
    %19 = vector.extract_strided_slice %18 {offsets = [0, 0], sizes = [8, 64], strides = [1, 1]} : vector<8x128xf32> to vector<8x64xf32>
    %20 = vector.extract_strided_slice %18 {offsets = [0, 64], sizes = [8, 64], strides = [1, 1]} : vector<8x128xf32> to vector<8x64xf32>
    %21 = vector.extract_strided_slice %15 {offsets = [0, 0], sizes = [8, 16], strides = [1, 1]} : vector<8x64xf32> to vector<8x16xf32>
    %22 = vector.extract_strided_slice %19 {offsets = [0, 0], sizes = [8, 16], strides = [1, 1]} : vector<8x64xf32> to vector<8x16xf32>
    %cst_8 = arith.constant dense<0.000000e+00> : vector<8x8xf32>
    %23 = tpu.matmul %21, %22, %cst_8 {dimension_numbers = #tpu.dot_dimension_numbers<[1], [1], [0], [0], [0, 0, 1, 0], [], []>} : vector<8x16xf32>, vector<8x16xf32>, vector<8x8xf32> -> vector<8x8xf32>
    %cst_9 = arith.constant dense<0xFF800000> : vector<8xf32>
    %24 = vector.multi_reduction <maximumf>, %23, %cst_9 [1] : vector<8x8xf32> to vector<8xf32>
    %25 = vector.shape_cast %24 : vector<8xf32> to vector<8x1xf32>
    %26 = vector.broadcast %25 : vector<8x1xf32> to vector<8x8xf32>
    %27 = arith.subf %23, %26 : vector<8x8xf32>
    %28 = math.exp %27 : vector<8x8xf32>
    %cst_10 = arith.constant dense<0.000000e+00> : vector<8xf32>
    %29 = vector.multi_reduction <add>, %28, %cst_10 [1] : vector<8x8xf32> to vector<8xf32>
    %30 = vector.shape_cast %29 : vector<8xf32> to vector<8x1xf32>
    %31 = tpu.reciprocal %30 {approx = true} : vector<8x1xf32> -> vector<8x1xf32>
    %32 = vector.broadcast %31 : vector<8x1xf32> to vector<8x8xf32>
    %33 = arith.mulf %28, %32 : vector<8x8xf32>
    %34 = vector.extract_strided_slice %20 {offsets = [0, 0], sizes = [8, 16], strides = [1, 1]} : vector<8x64xf32> to vector<8x16xf32>
    %cst_11 = arith.constant dense<0.000000e+00> : vector<8x16xf32>
    %35 = tpu.matmul %33, %34, %cst_11 {dimension_numbers = #tpu.dot_dimension_numbers<[1], [0], [0], [1], [0, 0, 1, 1], [], []>} : vector<8x8xf32>, vector<8x16xf32>, vector<8x16xf32> -> vector<8x16xf32>
    %36 = vector.extract_strided_slice %15 {offsets = [0, 16], sizes = [8, 16], strides = [1, 1]} : vector<8x64xf32> to vector<8x16xf32>
    %37 = vector.extract_strided_slice %19 {offsets = [0, 16], sizes = [8, 16], strides = [1, 1]} : vector<8x64xf32> to vector<8x16xf32>
    %cst_12 = arith.constant dense<0.000000e+00> : vector<8x8xf32>
    %38 = tpu.matmul %36, %37, %cst_12 {dimension_numbers = #tpu.dot_dimension_numbers<[1], [1], [0], [0], [0, 0, 1, 0], [], []>} : vector<8x16xf32>, vector<8x16xf32>, vector<8x8xf32> -> vector<8x8xf32>
    %cst_13 = arith.constant dense<0xFF800000> : vector<8xf32>
    %39 = vector.multi_reduction <maximumf>, %38, %cst_13 [1] : vector<8x8xf32> to vector<8xf32>
    %40 = vector.shape_cast %39 : vector<8xf32> to vector<8x1xf32>
    %41 = vector.broadcast %40 : vector<8x1xf32> to vector<8x8xf32>
    %42 = arith.subf %38, %41 : vector<8x8xf32>
    %43 = math.exp %42 : vector<8x8xf32>
    %cst_14 = arith.constant dense<0.000000e+00> : vector<8xf32>
    %44 = vector.multi_reduction <add>, %43, %cst_14 [1] : vector<8x8xf32> to vector<8xf32>
    %45 = vector.shape_cast %44 : vector<8xf32> to vector<8x1xf32>
    %46 = tpu.reciprocal %45 {approx = true} : vector<8x1xf32> -> vector<8x1xf32>
    %47 = vector.broadcast %46 : vector<8x1xf32> to vector<8x8xf32>
    %48 = arith.mulf %43, %47 : vector<8x8xf32>
    %49 = vector.extract_strided_slice %20 {offsets = [0, 16], sizes = [8, 16], strides = [1, 1]} : vector<8x64xf32> to vector<8x16xf32>
    %cst_15 = arith.constant dense<0.000000e+00> : vector<8x16xf32>
    %50 = tpu.matmul %48, %49, %cst_15 {dimension_numbers = #tpu.dot_dimension_numbers<[1], [0], [0], [1], [0, 0, 1, 1], [], []>} : vector<8x8xf32>, vector<8x16xf32>, vector<8x16xf32> -> vector<8x16xf32>
    %51 = vector.extract_strided_slice %15 {offsets = [0, 32], sizes = [8, 16], strides = [1, 1]} : vector<8x64xf32> to vector<8x16xf32>
    %52 = vector.extract_strided_slice %19 {offsets = [0, 32], sizes = [8, 16], strides = [1, 1]} : vector<8x64xf32> to vector<8x16xf32>
    %cst_16 = arith.constant dense<0.000000e+00> : vector<8x8xf32>
    %53 = tpu.matmul %51, %52, %cst_16 {dimension_numbers = #tpu.dot_dimension_numbers<[1], [1], [0], [0], [0, 0, 1, 0], [], []>} : vector<8x16xf32>, vector<8x16xf32>, vector<8x8xf32> -> vector<8x8xf32>
    %cst_17 = arith.constant dense<0xFF800000> : vector<8xf32>
    %54 = vector.multi_reduction <maximumf>, %53, %cst_17 [1] : vector<8x8xf32> to vector<8xf32>
    %55 = vector.shape_cast %54 : vector<8xf32> to vector<8x1xf32>
    %56 = vector.broadcast %55 : vector<8x1xf32> to vector<8x8xf32>
    %57 = arith.subf %53, %56 : vector<8x8xf32>
    %58 = math.exp %57 : vector<8x8xf32>
    %cst_18 = arith.constant dense<0.000000e+00> : vector<8xf32>
    %59 = vector.multi_reduction <add>, %58, %cst_18 [1] : vector<8x8xf32> to vector<8xf32>
    %60 = vector.shape_cast %59 : vector<8xf32> to vector<8x1xf32>
    %61 = tpu.reciprocal %60 {approx = true} : vector<8x1xf32> -> vector<8x1xf32>
    %62 = vector.broadcast %61 : vector<8x1xf32> to vector<8x8xf32>
    %63 = arith.mulf %58, %62 : vector<8x8xf32>
    %64 = vector.extract_strided_slice %20 {offsets = [0, 32], sizes = [8, 16], strides = [1, 1]} : vector<8x64xf32> to vector<8x16xf32>
    %cst_19 = arith.constant dense<0.000000e+00> : vector<8x16xf32>
    %65 = tpu.matmul %63, %64, %cst_19 {dimension_numbers = #tpu.dot_dimension_numbers<[1], [0], [0], [1], [0, 0, 1, 1], [], []>} : vector<8x8xf32>, vector<8x16xf32>, vector<8x16xf32> -> vector<8x16xf32>
    %66 = vector.extract_strided_slice %15 {offsets = [0, 48], sizes = [8, 16], strides = [1, 1]} : vector<8x64xf32> to vector<8x16xf32>
    %67 = vector.extract_strided_slice %19 {offsets = [0, 48], sizes = [8, 16], strides = [1, 1]} : vector<8x64xf32> to vector<8x16xf32>
    %cst_20 = arith.constant dense<0.000000e+00> : vector<8x8xf32>
    %68 = tpu.matmul %66, %67, %cst_20 {dimension_numbers = #tpu.dot_dimension_numbers<[1], [1], [0], [0], [0, 0, 1, 0], [], []>} : vector<8x16xf32>, vector<8x16xf32>, vector<8x8xf32> -> vector<8x8xf32>
    %cst_21 = arith.constant dense<0xFF800000> : vector<8xf32>
    %69 = vector.multi_reduction <maximumf>, %68, %cst_21 [1] : vector<8x8xf32> to vector<8xf32>
    %70 = vector.shape_cast %69 : vector<8xf32> to vector<8x1xf32>
    %71 = vector.broadcast %70 : vector<8x1xf32> to vector<8x8xf32>
    %72 = arith.subf %68, %71 : vector<8x8xf32>
    %73 = math.exp %72 : vector<8x8xf32>
    %cst_22 = arith.constant dense<0.000000e+00> : vector<8xf32>
    %74 = vector.multi_reduction <add>, %73, %cst_22 [1] : vector<8x8xf32> to vector<8xf32>
    %75 = vector.shape_cast %74 : vector<8xf32> to vector<8x1xf32>
    %76 = tpu.reciprocal %75 {approx = true} : vector<8x1xf32> -> vector<8x1xf32>
    %77 = vector.broadcast %76 : vector<8x1xf32> to vector<8x8xf32>
    %78 = arith.mulf %73, %77 : vector<8x8xf32>
    %79 = vector.extract_strided_slice %20 {offsets = [0, 48], sizes = [8, 16], strides = [1, 1]} : vector<8x64xf32> to vector<8x16xf32>
    %cst_23 = arith.constant dense<0.000000e+00> : vector<8x16xf32>
    %80 = tpu.matmul %78, %79, %cst_23 {dimension_numbers = #tpu.dot_dimension_numbers<[1], [0], [0], [1], [0, 0, 1, 1], [], []>} : vector<8x8xf32>, vector<8x16xf32>, vector<8x16xf32> -> vector<8x16xf32>
    %81 = tpu.concatenate %35, %50, %65, %80 in 1 : vector<8x16xf32>, vector<8x16xf32>, vector<8x16xf32>, vector<8x16xf32> -> vector<8x64xf32>
    %c0_24 = arith.constant 0 : index
    %c0_25 = arith.constant 0 : index
    %82 = vector.load %arg9[%c0_24, %c0_25] : memref<8x32xf32, #tpu.memory_space<vmem>>, vector<8x32xf32>
    %83 = arith.index_cast %arg2 : i32 to index
    %c0_26 = arith.constant 0 : index
    %c0_27 = arith.constant 0 : index
    %84 = vector.load %arg5[%83, %c0_26, %c0_27] : memref<1x64x32xf32, #tpu.memory_space<vmem>>, vector<1x64x32xf32>
    %85 = vector.shape_cast %84 : vector<1x64x32xf32> to vector<64x32xf32>
    %cst_28 = arith.constant dense<0.000000e+00> : vector<8x32xf32>
    %86 = tpu.matmul %81, %85, %cst_28 {dimension_numbers = #tpu.dot_dimension_numbers<[1], [0], [0], [1], [0, 0, 1, 1], [], []>} : vector<8x64xf32>, vector<64x32xf32>, vector<8x32xf32> -> vector<8x32xf32>
    %87 = arith.addf %82, %86 : vector<8x32xf32>
    %c0_29 = arith.constant 0 : index
    %c0_30 = arith.constant 0 : index
    %88 = vector.load %arg9[%c0_29, %c0_30] : memref<8x32xf32, #tpu.memory_space<vmem>>, vector<8x32xf32>
    tpu.vector_store %arg9[%c0_29, %c0_30], %87 {strides = array<i32>} : memref<8x32xf32, #tpu.memory_space<vmem>>, vector<8x32xf32>,
    %c0_i32_31 = arith.constant 0 : i32
    %89 = arith.cmpi eq, %arg2, %c0_i32_31 : i32
    %90 = arith.extui %89 : i1 to i32
    %c0_i32_32 = arith.constant 0 : i32
    %91 = arith.cmpi ne, %90, %c0_i32_32 : i32
    scf.if %91 {
      %c0_33 = arith.constant 0 : index
      %c0_34 = arith.constant 0 : index
      %92 = vector.load %arg9[%c0_33, %c0_34] : memref<8x32xf32, #tpu.memory_space<vmem>>, vector<8x32xf32>
      %c0_35 = arith.constant 0 : index
      %c0_36 = arith.constant 0 : index
      %c0_37 = arith.constant 0 : index
      %93 = vector.load %arg7[%c0_35, %c0_36, %c0_37] : memref<1x8x32xf32, #tpu.memory_space<vmem>>, vector<1x8x32xf32>
      %94 = vector.shape_cast %93 : vector<1x8x32xf32> to vector<8x32xf32>
      %95 = vector.shape_cast %92 : vector<8x32xf32> to vector<1x8x32xf32>
      tpu.vector_store %arg7[%c0_35, %c0_36, %c0_37], %95 {strides = array<i32>} : memref<1x8x32xf32, #tpu.memory_space<vmem>>, vector<1x8x32xf32>,
    } else {
    }
    return
  }
  func.func @transform_0(%arg0: i32, %arg1: i32, %arg2: i32) -> (i32, i32, i32) {
    %c0_i32 = arith.constant 0 : i32
    %c0_i32_0 = arith.constant 0 : i32
    %c0_i32_1 = arith.constant 0 : i32
    return %arg0, %c0_i32, %c0_i32_0 : i32, i32, i32
  }
  func.func @transform_1(%arg0: i32, %arg1: i32, %arg2: i32) -> (i32, i32, i32) {
    %c0_i32 = arith.constant 0 : i32
    %c0_i32_0 = arith.constant 0 : i32
    %c0_i32_1 = arith.constant 0 : i32
    %c0_i32_2 = arith.constant 0 : i32
    return %c0_i32, %c0_i32_0, %c0_i32_1 : i32, i32, i32
  }
  func.func @transform_2(%arg0: i32, %arg1: i32, %arg2: i32) -> (i32, i32, i32) {
    %c0_i32 = arith.constant 0 : i32
    %c0_i32_0 = arith.constant 0 : i32
    %c0_i32_1 = arith.constant 0 : i32
    %c0_i32_2 = arith.constant 0 : i32
    return %c0_i32, %c0_i32_0, %c0_i32_1 : i32, i32, i32
  }
  func.func @transform_3(%arg0: i32, %arg1: i32, %arg2: i32) -> (i32, i32) {
    %c0_i32 = arith.constant 0 : i32
    %c0_i32_0 = arith.constant 0 : i32
    %c0_i32_1 = arith.constant 0 : i32
    return %c0_i32, %c0_i32_0 : i32, i32
  }
  func.func @transform_4(%arg0: i32, %arg1: i32, %arg2: i32) -> (i32, i32, i32) {
    %c0_i32 = arith.constant 0 : i32
    %c0_i32_0 = arith.constant 0 : i32
    return %arg0, %arg1, %c0_i32 : i32, i32, i32
  }
}

</mosaic_0001>

<llo_original>
// kernel: tpu_custom_call.1
$region0: #{tpu_custom_call.1}
  #allocation0 [shape = 'u32[]', space=smem, size = 0x4, offset = 0x4, fixed_abs, tag = 'smem constant byte address 0x4 - core index']
  #allocation1 [shape = 'u32[72,128]{1,0:T(1,128)}', space=vmem, size = 0x9000, scoped, tag = 'internal scratch']
  #allocation2 [shape = 'f32[1,8,128]{2,1,0:T(8,128)}', space=vmem, size = 0x1000, scoped, tag = 'scratch operand']
  #allocation3 [shape = 'f32[8,32]{1,0:T(8,128)}', space=vmem, size = 0x1000, scoped, tag = 'scratch operand']
  %s0 = inlined_call_operand.vmem [shape: f32[2,8,32], index: 0, kind: input, shape index: {}]
  %s1 = inlined_call_operand.vmem [shape: f32[1,32,192], index: 1, kind: input, shape index: {}]
  %s2 = inlined_call_operand.vmem [shape: f32[1,64,32], index: 2, kind: input, shape index: {}]
  %s3 = inlined_call_operand.vmem [shape: f32[1,32], index: 3, kind: input, shape index: {}]
  %s4 = inlined_call_operand.hbm [shape: f32[2,8,32], index: 4, kind: output, shape index: {}]
  %s5 = sld [smem:[#allocation0]]
  $region61: #{tpu_custom_call.1} parent=0
    _
  %s7 = ssub.s32 1, %s5
  %s8 = scalar_select 0, %s7, %s5
  $region1: #{tpu_custom_call.1} parent=0
    #allocation4 [shape = 'u8[8192]{0}', space=vmem, size = 0x2000, scoped, tag = 'output window, operand 0']
    #allocation5 [shape = 's32[2]{0}', space=sflag, size = 0x8, scoped, tag = 'scoped memory for tpu_custom_call.1']
    %9 = vsyncpa [#allocation5], 0
    %s10 = scalar_lea.sflag [#allocation5], 1
    %11 = vsyncpa %s10, 0
    loop: start=0, step=1, limit=4
    $region2: #{tpu_custom_call.1} parent=1 // loop_pre_header
      _
    $region3: #{tpu_custom_call.1} parent=1 // loop_header
      %s13 = sphi 0, %s17
      %p14 = scmp.ge.s32.totalorder %s13, 4
      %s20 = sphi 0, %s39
      %s21 = sphi 0, %s35
      %s22 = sphi 0, %s31
      %s23 = sphi 0, %s20
      %s24 = sphi 0, %s21
      %s25 = sphi 0, %s22
      %s26 = sphi 0, %s23
      %s27 = sphi 0, %s24
      %s28 = sphi 0, %s25
      %s42 = sphi 0, %s44
      %s45 = sphi 0, %s42
      %s46 = sphi 0, %s45
      %s62 = sphi 0, %s46
      %s66 = sphi 0, %s66
      %s68 = sphi 0, %s66
      %s69 = sphi 0, %s68
      %s83 = sphi 0, %s69
      %s87 = sphi 0, %s87
      %s89 = sphi 0, %s87
      %s90 = sphi 0, %s89
      %s104 = sphi 0, %s90
      %s108 = sphi 0, %s108
      %s110 = sphi 0, %s108
      %s111 = sphi 0, %s110
      %s125 = sphi 0, %s111
      %s133 = sphi 0, %s135
      %s136 = sphi 0, %s133
      %s137 = sphi 0, %s136
      %s153 = sphi 0, %s137
    $region4: #{tpu_custom_call.1} parent=1 // loop_header_branch
      %16 = sbr.rel (%p14) target = $region8
    $region5: #{tpu_custom_call.1} parent=1 // loop_body
      %s18 = ssub.s32 %s13, 1
      %s19 = ssub.s32 %s13, 2
      %s29 = sadd.s32 1, %s22
      %p30 = scmp.ge.s32.totalorder %s29, 1
      %s31 = scalar_select %p30, 0, %s29
      %s32 = sadd.s32 1, %s21
      %s33 = scalar_select %p30, %s32, %s21
      %p34 = scmp.ge.s32.totalorder %s33, 1
      %s35 = scalar_select %p34, 0, %s33
      %s36 = sadd.s32 1, %s20
      %s37 = scalar_select %p34, %s36, %s20
      %p38 = scmp.ge.s32.totalorder %s37, 2
      %s39 = scalar_select %p38, 0, %s37
      %s40 = ssub.s32 %s20, %s39
      %p41 = scmp.eq.s32.totalorder %s40, 0
      %s43 = sadd.s32 %s42, 1
      %s44 = scalar_select %p41, %s42, %s43
      %p47 = pneg %p41
      %p48 = scmp.eq.s32.totalorder %s13, 1
      %p49 = por %p47, %p48
      %p50 = scmp.ne.s32.totalorder %s42, %s45
      %p51 = scmp.eq.s32.totalorder %s13, 0
      %p52 = por %p50, %p51
      %p53 = scmp.ne.s32.totalorder %s42, %s45
      %p54 = scmp.eq.s32.totalorder %s18, 1
      %p55 = por %p53, %p54
      %p56 = scmp.ne.s32.totalorder %s45, %s46
      %p57 = scmp.eq.s32.totalorder %s18, 0
      %p58 = por %p56, %p57
      %p59 = scmp.ne.s32.totalorder %s45, %s46
      %p60 = scmp.eq.s32.totalorder %s19, 1
      %p61 = por %p59, %p60
      %p63 = scmp.ne.s32.totalorder %s46, %s62
      %p64 = scmp.eq.s32.totalorder %s19, 0
      %p65 = por %p63, %p64
      %s67 = sadd.s32 %s66, 1
      %p70 = scmp.eq.s32.totalorder %s13, 1
      %p71 = scmp.ne.s32.totalorder %s66, %s68
      %p72 = scmp.eq.s32.totalorder %s13, 0
      %p73 = por %p71, %p72
      %p74 = scmp.ne.s32.totalorder %s66, %s68
      %p75 = scmp.eq.s32.totalorder %s18, 1
      %p76 = por %p74, %p75
      %p77 = scmp.ne.s32.totalorder %s68, %s69
      %p78 = scmp.eq.s32.totalorder %s18, 0
      %p79 = por %p77, %p78
      %p80 = scmp.ne.s32.totalorder %s68, %s69
      %p81 = scmp.eq.s32.totalorder %s19, 1
      %p82 = por %p80, %p81
      %p84 = scmp.ne.s32.totalorder %s69, %s83
      %p85 = scmp.eq.s32.totalorder %s19, 0
      %p86 = por %p84, %p85
      %s88 = sadd.s32 %s87, 1
      %p91 = scmp.eq.s32.totalorder %s13, 1
      %p92 = scmp.ne.s32.totalorder %s87, %s89
      %p93 = scmp.eq.s32.totalorder %s13, 0
      %p94 = por %p92, %p93
      %p95 = scmp.ne.s32.totalorder %s87, %s89
      %p96 = scmp.eq.s32.totalorder %s18, 1
      %p97 = por %p95, %p96
      %p98 = scmp.ne.s32.totalorder %s89, %s90
      %p99 = scmp.eq.s32.totalorder %s18, 0
      %p100 = por %p98, %p99
      %p101 = scmp.ne.s32.totalorder %s89, %s90
      %p102 = scmp.eq.s32.totalorder %s19, 1
      %p103 = por %p101, %p102
      %p105 = scmp.ne.s32.totalorder %s90, %s104
      %p106 = scmp.eq.s32.totalorder %s19, 0
      %p107 = por %p105, %p106
      %s109 = sadd.s32 %s108, 1
      %p112 = scmp.eq.s32.totalorder %s13, 1
      %p113 = scmp.ne.s32.totalorder %s108, %s110
      %p114 = scmp.eq.s32.totalorder %s13, 0
      %p115 = por %p113, %p114
      %p116 = scmp.ne.s32.totalorder %s108, %s110
      %p117 = scmp.eq.s32.totalorder %s18, 1
      %p118 = por %p116, %p117
      %p119 = scmp.ne.s32.totalorder %s110, %s111
      %p120 = scmp.eq.s32.totalorder %s18, 0
      %p121 = por %p119, %p120
      %p122 = scmp.ne.s32.totalorder %s110, %s111
      %p123 = scmp.eq.s32.totalorder %s19, 1
      %p124 = por %p122, %p123
      %p126 = scmp.ne.s32.totalorder %s111, %s125
      %p127 = scmp.eq.s32.totalorder %s19, 0
      %p128 = por %p126, %p127
      %s129 = ssub.s32 %s20, %s39
      %s130 = ssub.s32 %s21, %s35
      %s131 = sor.u32 %s129, %s130
      %p132 = scmp.eq.s32.totalorder %s131, 0
      %s134 = sadd.s32 %s133, 1
      %s135 = scalar_select %p132, %s133, %s134
      %p138 = pneg %p132
      %p139 = scmp.eq.s32.totalorder %s13, 1
      %p140 = por %p138, %p139
      %p141 = scmp.ne.s32.totalorder %s133, %s136
      %p142 = scmp.eq.s32.totalorder %s13, 0
      %p143 = por %p141, %p142
      %p144 = scmp.ne.s32.totalorder %s133, %s136
      %p145 = scmp.eq.s32.totalorder %s18, 1
      %p146 = por %p144, %p145
      %p147 = scmp.ne.s32.totalorder %s136, %s137
      %p148 = scmp.eq.s32.totalorder %s18, 0
      %p149 = por %p147, %p148
      %p150 = scmp.ne.s32.totalorder %s136, %s137
      %p151 = scmp.eq.s32.totalorder %s19, 1
      %p152 = por %p150, %p151
      %p154 = scmp.ne.s32.totalorder %s137, %s153
      %p155 = scmp.eq.s32.totalorder %s19, 0
      %p156 = por %p154, %p155
      %p157 = scmp.le.s32.totalorder 1, %s13
      %p158 = scmp.lt.s32.totalorder %s13, 3
      %p159 = pnand %p157, %p158
      %p160 = pneg %p159
      // Predicated region
      $region9: #{tpu_custom_call.1} parent=5 // pred_check
        _
      $region10: #{tpu_custom_call.1} parent=5 // pred_check_branch
        %162 = sbr.rel (%p159) target = $region12
      $region11: #{tpu_custom_call.1} parent=5 // pred_region
        %s163 = ssub.s32 %s13, 1
        // Predicated region
        $region13: #{tpu_custom_call.1} parent=11 // pred_check
          %p164 = pneg %p79
        $region14: #{tpu_custom_call.1} parent=11 // pred_check_branch
          %166 = sbr.rel (%p164) target = $region16
        $region15: #{tpu_custom_call.1} parent=11 // pred_region
          _
        $region16: #{tpu_custom_call.1} parent=11 // pred_fallthru
          _
        // Predicated region
        $region17: #{tpu_custom_call.1} parent=11 // pred_check
          %p167 = pneg %p100
        $region18: #{tpu_custom_call.1} parent=11 // pred_check_branch
          %169 = sbr.rel (%p167) target = $region20
        $region19: #{tpu_custom_call.1} parent=11 // pred_region
          _
        $region20: #{tpu_custom_call.1} parent=11 // pred_fallthru
          _
        // Predicated region
        $region21: #{tpu_custom_call.1} parent=11 // pred_check
          %p170 = pneg %p121
        $region22: #{tpu_custom_call.1} parent=11 // pred_check_branch
          %172 = sbr.rel (%p170) target = $region24
        $region23: #{tpu_custom_call.1} parent=11 // pred_region
          _
        $region24: #{tpu_custom_call.1} parent=11 // pred_fallthru
          _
      $region12: #{tpu_custom_call.1} parent=5 // pred_fallthru
        _
      %p173 = scmp.lt.s32.totalorder %s13, 2
      // Predicated region
      $region25: #{tpu_custom_call.1} parent=5 // pred_check
        %p174 = pneg %p173
      $region26: #{tpu_custom_call.1} parent=5 // pred_check_branch
        %176 = sbr.rel (%p174) target = $region28
      $region27: #{tpu_custom_call.1} parent=5 // pred_region
        // Predicated region
        $region29: #{tpu_custom_call.1} parent=27 // pred_check
          %p177 = pneg %p52
        $region30: #{tpu_custom_call.1} parent=27 // pred_check_branch
          %179 = sbr.rel (%p177) target = $region32
        $region31: #{tpu_custom_call.1} parent=27 // pred_region
          %p180 = scmp.lt.s32.totalorder %s20, 1
          %s181 = scalar_select %p180, %s20, 1
          %s182 = smul.addr %s181, 8
          %s183 = scalar_lea.vmem %s0, %s182
        $region32: #{tpu_custom_call.1} parent=27 // pred_fallthru
          _
      $region28: #{tpu_custom_call.1} parent=5 // pred_fallthru
        _
      %p184 = scmp.le.s32.totalorder 1, %s13
      %p185 = scmp.lt.s32.totalorder %s13, 3
      %p186 = pnand %p184, %p185
      %p187 = pneg %p186
      // Predicated region
      $region33: #{tpu_custom_call.1} parent=5 // pred_check
        _
      $region34: #{tpu_custom_call.1} parent=5 // pred_check_branch
        %189 = sbr.rel (%p186) target = $region36
      $region35: #{tpu_custom_call.1} parent=5 // pred_region
        %s190 = ssub.s32 %s13, 1
        %p191 = scmp.lt.s32.totalorder %s23, 1
        %s192 = scalar_select %p191, %s23, 1
        %s193 = smul.addr %s192, 8
        %s194 = scalar_lea.vmem %s0, %s193
        %p195 = pneg %p58
        %p196 = pneg %p55
        %p197 = pneg %p79
        %p198 = pneg %p76
        %p199 = pneg %p100
        %p200 = pneg %p97
        %p201 = pneg %p121
        %p202 = pneg %p118
        %p203 = pneg %p149
        %p204 = pneg %p146
        %s205 = sand.u32 %s136, 1
        %s206 = scalar_lea.sflag [#allocation5], %s205
        %s207 = sand.u32 %s136, 1
        %s208 = smul.addr %s207, 8
        %s209 = scalar_lea.vmem [#allocation4], %s208
        %p210 = scmp.lt.s32.totalorder %s23, 1
        %s211 = scalar_select %p210, %s23, 1
        %s212 = smul.addr %s211, 8
        %s213 = scalar_lea.vmem %s0, %s212
        %s214 = smul.u32 %s25, 8
        %s215 = smul.addr %s214, 8
        %s216 = scalar_lea.vmem %s1, %s215
        %v217 = vld [vmem:[%s216] sm:$0xff]
        %v218 = vld [vmem:[%s216 + $0x8] sm:$0xff]
        %v219 = vld [vmem:[%s216 + $0x10] sm:$0xff]
        %v220 = vld [vmem:[%s216 + $0x18] sm:$0xff]
        %v221 = vld [vmem:[%s216 + $0x20] sm:$0xff]
        %v222 = vld [vmem:[%s216 + $0x28] sm:$0xff]
        %v223 = vld [vmem:[%s216 + $0x30] sm:$0xff]
        %v224 = vld [vmem:[%s216 + $0x38] sm:$0xff]
        %p225 = scmp.eq.s32.totalorder %s24, 0
        // Predicated region
        $region37: #{tpu_custom_call.1} parent=35 // pred_check
          %p226 = pneg %p225
        $region38: #{tpu_custom_call.1} parent=35 // pred_check_branch
          %228 = sbr.rel (%p226) target = $region40
        $region39: #{tpu_custom_call.1} parent=35 // pred_region
          %v229 = vld [vmem:[%s213] sm:$0xff]
          %238 = vrot.lane.b32.xlu0 %v217, 64
          %v239 = vpop.permute.xlu0 %238
          %240 = vrot.lane.b32.xlu0 %v218, 64
          %v241 = vpop.permute.xlu0 %240
          %242 = vrot.lane.b32.xlu0 %v219, 64
          %v243 = vpop.permute.xlu0 %242
          %244 = vrot.lane.b32.xlu0 %v220, 64
          %v245 = vpop.permute.xlu0 %244
          %246 = vrot.lane.b32.xlu0 %v221, 64
          %v247 = vpop.permute.xlu0 %246
          %248 = vrot.lane.b32.xlu0 %v222, 64
          %v249 = vpop.permute.xlu0 %248
          %250 = vrot.lane.b32.xlu0 %v223, 64
          %v251 = vpop.permute.xlu0 %250
          %252 = vrot.lane.b32.xlu0 %v224, 64
          %v253 = vpop.permute.xlu0 %252
          %vm254 = vcmask 523264
          %v255 = vsel %vm254, %v239, %v241
          %v256 = vsel %vm254, %v243, %v245
          %v257 = vsel %vm254, %v247, %v249
          %v258 = vsel %vm254, %v251, %v253
          %vm263 = vcmask 261120
          %v265 = vsel %vm263, %v229, 0
          %267 = vmatpush.msra.mxu0 0.0
          %268 = vmatpush.msra.mxu0 0.0
          %269 = vmatpush.msra.mxu0 0.0
          %270 = vmatpush.msra.mxu0 0.0
          %271 = vmatpush.msra.mxu0 0.0
          %272 = vmatpush.msra.mxu0 0.0
          %273 = vmatpush.msra.mxu0 0.0
          %274 = vmatpush.msra.mxu0 0.0
          %275 = vmatpush.msra.mxu0 0.0
          %276 = vmatpush.msra.mxu0 0.0
          %277 = vmatpush.msra.mxu0 0.0
          %278 = vmatpush.msra.mxu0 0.0
          %279 = vmatpush.msra.mxu0 %v258
          %280 = vmatpush.msra.mxu0 %v257
          %281 = vmatpush.msra.mxu0 %v256
          %282 = vmatpush.msra.mxu0 %v255
          %283 = vmatmul.f32.gmra.mxu0 %v265
          %v284 = vpop.f32.mrf.mxu0
          %v285 = vadd.f32 0.0, %v284
          %286 = vdwg.mxu0
          %s287 = scalar_lea.vmem [#allocation2], %s214
          %288 = vst [vmem:[%s287] sm:$0xff] %v285
        $region40: #{tpu_custom_call.1} parent=35 // pred_fallthru
          _
        %p289 = scmp.eq.s32.totalorder %s25, 0
        // Predicated region
        $region41: #{tpu_custom_call.1} parent=35 // pred_check
          %p290 = pneg %p289
        $region42: #{tpu_custom_call.1} parent=35 // pred_check_branch
          %292 = sbr.rel (%p290) target = $region44
        $region43: #{tpu_custom_call.1} parent=35 // pred_region
          %v293 = vld [vmem:[%s3] sm:$0x1]
          %v295 = vperm.slane %v293, 0
          %vm297 = vcmask 261120
          %298 = vst.msk [vmem:[#allocation3] sm:$0xff] %vm297, %v295
        $region44: #{tpu_custom_call.1} parent=35 // pred_fallthru
          _
        %s299 = smul.u32 %s24, 8
        %s300 = scalar_lea.vmem %s213, %s299
        %v301 = vld [vmem:[%s300] sm:$0xff]
        %vm302 = vcmask 261120
        %v304 = vsel %vm302, %v301, 0
        %306 = vmatpush.msra.mxu0 0.0
        %307 = vmatpush.msra.mxu0 0.0
        %308 = vmatpush.msra.mxu0 0.0
        %309 = vmatpush.msra.mxu0 0.0
        %310 = vmatpush.msra.mxu0 0.0
        %311 = vmatpush.msra.mxu0 0.0
        %312 = vmatpush.msra.mxu0 0.0
        %313 = vmatpush.msra.mxu0 0.0
        %314 = vmatpush.msra.mxu0 0.0
        %315 = vmatpush.msra.mxu0 0.0
        %316 = vmatpush.msra.mxu0 0.0
        %317 = vmatpush.msra.mxu0 0.0
        %318 = vmatpush.msra.mxu0 %v223
        %319 = vmatpush.msra.mxu0 %v221
        %320 = vmatpush.msra.mxu0 %v219
        %321 = vmatpush.msra.mxu0 %v217
        %322 = vmatmul.f32.gmra.mxu0 %v304
        %v323 = vpop.f32.mrf.mxu0
        %v324 = vadd.f32 0.0, %v323
        %325 = vdwg.mxu0
        %s326 = scalar_lea.vmem [#allocation2], %s214
        %v327 = vld [vmem:[%s326] sm:$0xff]
        %vm328 = vcmask 130048
        %v330 = vsel %vm328, %v324, 0
        %v333 = vsel %vm328, %v327, 0
        %335 = vmatpush.xpose.msra.mxu0 0.0
        %336 = vmatpush.xpose.msra.mxu0 0.0
        %337 = vmatpush.xpose.msra.mxu0 0.0
        %338 = vmatpush.xpose.msra.mxu0 0.0
        %339 = vmatpush.xpose.msra.mxu0 0.0
        %340 = vmatpush.xpose.msra.mxu0 0.0
        %341 = vmatpush.xpose.msra.mxu0 0.0
        %342 = vmatpush.xpose.msra.mxu0 0.0
        %343 = vmatpush.xpose.msra.mxu0 0.0
        %344 = vmatpush.xpose.msra.mxu0 0.0
        %345 = vmatpush.xpose.msra.mxu0 0.0
        %346 = vmatpush.xpose.msra.mxu0 0.0
        %347 = vmatpush.xpose.msra.mxu0 0.0
        %348 = vmatpush.xpose.msra.mxu0 0.0
        %349 = vmatpush.xpose.msra.mxu0 0.0
        %350 = vmatpush.xpose.msra.mxu0 %v333
        %351 = vmatmul.f32.gmra.mxu0 %v330
        %v352 = vpop.f32.mrf.mxu0
        %v353 = vadd.f32 0.0, %v352
        %354 = vdwg.mxu0
        %vm355 = vcmask 64512
        %v356 = vsel %vm355, %v353, -inf
        %357 = vmax.xlane.f32.xlu0 %v356
        %v358 = vpop.xlane.xlu0 %357
        %v359 = vsub.f32 %v353, %v358
        %v360 = vmul.f32 %v359, 1.442695
        %v361 = vpow.pop %v360
        %v362 = vsel %vm355, %v361, 0.0
        %363 = vadd.xlane.f32.xlu0 %v362
        %v364 = vpop.xlane.xlu0 %363
        %v365 = vrcp.pop %v364
        %v366 = vmul.f32 %v361, %v365
        %367 = vrot.lane.b32.xlu0 %v327, 64
        %v368 = vpop.permute.xlu0 %367
        %v371 = vsel %vm355, %v366, 0
        %373 = vmatpush.msra.mxu0 0.0
        %374 = vmatpush.msra.mxu0 0.0
        %375 = vmatpush.msra.mxu0 0.0
        %376 = vmatpush.msra.mxu0 0.0
        %377 = vmatpush.msra.mxu0 0.0
        %378 = vmatpush.msra.mxu0 0.0
        %379 = vmatpush.msra.mxu0 0.0
        %380 = vmatpush.msra.mxu0 0.0
        %381 = vmatpush.msra.mxu0 0.0
        %382 = vmatpush.msra.mxu0 0.0
        %383 = vmatpush.msra.mxu0 0.0
        %384 = vmatpush.msra.mxu0 0.0
        %385 = vmatpush.msra.mxu0 0.0
        %386 = vmatpush.msra.mxu0 0.0
        %387 = vmatpush.msra.mxu0 0.0
        %388 = vmatpush.msra.mxu0 %v368
        %389 = vmatmul.f32.gmra.mxu0 %v371
        %v390 = vpop.f32.mrf.mxu0
        %v391 = vadd.f32 0.0, %v390
        %392 = vdwg.mxu0
        %393 = vrot.lane.b32.xlu0 %v324, 112
        %v394 = vpop.permute.xlu0 %393
        %395 = vrot.lane.b32.xlu0 %v327, 112
        %v396 = vpop.permute.xlu0 %395
        %v397 = vsel %vm328, %v394, 0
        %v399 = vsel %vm328, %v396, 0
        %401 = vmatpush.xpose.msra.mxu0 0.0
        %402 = vmatpush.xpose.msra.mxu0 0.0
        %403 = vmatpush.xpose.msra.mxu0 0.0
        %404 = vmatpush.xpose.msra.mxu0 0.0
        %405 = vmatpush.xpose.msra.mxu0 0.0
        %406 = vmatpush.xpose.msra.mxu0 0.0
        %407 = vmatpush.xpose.msra.mxu0 0.0
        %408 = vmatpush.xpose.msra.mxu0 0.0
        %409 = vmatpush.xpose.msra.mxu0 0.0
        %410 = vmatpush.xpose.msra.mxu0 0.0
        %411 = vmatpush.xpose.msra.mxu0 0.0
        %412 = vmatpush.xpose.msra.mxu0 0.0
        %413 = vmatpush.xpose.msra.mxu0 0.0
        %414 = vmatpush.xpose.msra.mxu0 0.0
        %415 = vmatpush.xpose.msra.mxu0 0.0
        %416 = vmatpush.xpose.msra.mxu0 %v399
        %417 = vmatmul.f32.gmra.mxu0 %v397
        %v418 = vpop.f32.mrf.mxu0
        %v419 = vadd.f32 0.0, %v418
        %420 = vdwg.mxu0
        %v421 = vsel %vm355, %v419, -inf
        %422 = vmax.xlane.f32.xlu0 %v421
        %v423 = vpop.xlane.xlu0 %422
        %v424 = vsub.f32 %v419, %v423
        %v425 = vmul.f32 %v424, 1.442695
        %v426 = vpow.pop %v425
        %v427 = vsel %vm355, %v426, 0.0
        %428 = vadd.xlane.f32.xlu0 %v427
        %v429 = vpop.xlane.xlu0 %428
        %v430 = vrcp.pop %v429
        %v431 = vmul.f32 %v426, %v430
        %432 = vrot.lane.b32.xlu0 %v327, 48
        %v433 = vpop.permute.xlu0 %432
        %v436 = vsel %vm355, %v431, 0
        %438 = vmatpush.msra.mxu0 0.0
        %439 = vmatpush.msra.mxu0 0.0
        %440 = vmatpush.msra.mxu0 0.0
        %441 = vmatpush.msra.mxu0 0.0
        %442 = vmatpush.msra.mxu0 0.0
        %443 = vmatpush.msra.mxu0 0.0
        %444 = vmatpush.msra.mxu0 0.0
        %445 = vmatpush.msra.mxu0 0.0
        %446 = vmatpush.msra.mxu0 0.0
        %447 = vmatpush.msra.mxu0 0.0
        %448 = vmatpush.msra.mxu0 0.0
        %449 = vmatpush.msra.mxu0 0.0
        %450 = vmatpush.msra.mxu0 0.0
        %451 = vmatpush.msra.mxu0 0.0
        %452 = vmatpush.msra.mxu0 0.0
        %453 = vmatpush.msra.mxu0 %v433
        %454 = vmatmul.f32.gmra.mxu0 %v436
        %v455 = vpop.f32.mrf.mxu0
        %v456 = vadd.f32 0.0, %v455
        %457 = vdwg.mxu0
        %458 = vrot.lane.b32.xlu0 %v324, 96
        %v459 = vpop.permute.xlu0 %458
        %460 = vrot.lane.b32.xlu0 %v327, 96
        %v461 = vpop.permute.xlu0 %460
        %v462 = vsel %vm328, %v459, 0
        %v464 = vsel %vm328, %v461, 0
        %466 = vmatpush.xpose.msra.mxu0 0.0
        %467 = vmatpush.xpose.msra.mxu0 0.0
        %468 = vmatpush.xpose.msra.mxu0 0.0
        %469 = vmatpush.xpose.msra.mxu0 0.0
        %470 = vmatpush.xpose.msra.mxu0 0.0
        %471 = vmatpush.xpose.msra.mxu0 0.0
        %472 = vmatpush.xpose.msra.mxu0 0.0
        %473 = vmatpush.xpose.msra.mxu0 0.0
        %474 = vmatpush.xpose.msra.mxu0 0.0
        %475 = vmatpush.xpose.msra.mxu0 0.0
        %476 = vmatpush.xpose.msra.mxu0 0.0
        %477 = vmatpush.xpose.msra.mxu0 0.0
        %478 = vmatpush.xpose.msra.mxu0 0.0
        %479 = vmatpush.xpose.msra.mxu0 0.0
        %480 = vmatpush.xpose.msra.mxu0 0.0
        %481 = vmatpush.xpose.msra.mxu0 %v464
        %482 = vmatmul.f32.gmra.mxu0 %v462
        %v483 = vpop.f32.mrf.mxu0
        %v484 = vadd.f32 0.0, %v483
        %485 = vdwg.mxu0
        %v486 = vsel %vm355, %v484, -inf
        %487 = vmax.xlane.f32.xlu0 %v486
        %v488 = vpop.xlane.xlu0 %487
        %v489 = vsub.f32 %v484, %v488
        %v490 = vmul.f32 %v489, 1.442695
        %v491 = vpow.pop %v490
        %v492 = vsel %vm355, %v491, 0.0
        %493 = vadd.xlane.f32.xlu0 %v492
        %v494 = vpop.xlane.xlu0 %493
        %v495 = vrcp.pop %v494
        %v496 = vmul.f32 %v491, %v495
        %497 = vrot.lane.b32.xlu0 %v327, 32
        %v498 = vpop.permute.xlu0 %497
        %v501 = vsel %vm355, %v496, 0
        %503 = vmatpush.msra.mxu0 0.0
        %504 = vmatpush.msra.mxu0 0.0
        %505 = vmatpush.msra.mxu0 0.0
        %506 = vmatpush.msra.mxu0 0.0
        %507 = vmatpush.msra.mxu0 0.0
        %508 = vmatpush.msra.mxu0 0.0
        %509 = vmatpush.msra.mxu0 0.0
        %510 = vmatpush.msra.mxu0 0.0
        %511 = vmatpush.msra.mxu0 0.0
        %512 = vmatpush.msra.mxu0 0.0
        %513 = vmatpush.msra.mxu0 0.0
        %514 = vmatpush.msra.mxu0 0.0
        %515 = vmatpush.msra.mxu0 0.0
        %516 = vmatpush.msra.mxu0 0.0
        %517 = vmatpush.msra.mxu0 0.0
        %518 = vmatpush.msra.mxu0 %v498
        %519 = vmatmul.f32.gmra.mxu0 %v501
        %v520 = vpop.f32.mrf.mxu0
        %v521 = vadd.f32 0.0, %v520
        %522 = vdwg.mxu0
        %523 = vrot.lane.b32.xlu0 %v324, 80
        %v524 = vpop.permute.xlu0 %523
        %525 = vrot.lane.b32.xlu0 %v327, 80
        %v526 = vpop.permute.xlu0 %525
        %v527 = vsel %vm328, %v524, 0
        %v529 = vsel %vm328, %v526, 0
        %531 = vmatpush.xpose.msra.mxu0 0.0
        %532 = vmatpush.xpose.msra.mxu0 0.0
        %533 = vmatpush.xpose.msra.mxu0 0.0
        %534 = vmatpush.xpose.msra.mxu0 0.0
        %535 = vmatpush.xpose.msra.mxu0 0.0
        %536 = vmatpush.xpose.msra.mxu0 0.0
        %537 = vmatpush.xpose.msra.mxu0 0.0
        %538 = vmatpush.xpose.msra.mxu0 0.0
        %539 = vmatpush.xpose.msra.mxu0 0.0
        %540 = vmatpush.xpose.msra.mxu0 0.0
        %541 = vmatpush.xpose.msra.mxu0 0.0
        %542 = vmatpush.xpose.msra.mxu0 0.0
        %543 = vmatpush.xpose.msra.mxu0 0.0
        %544 = vmatpush.xpose.msra.mxu0 0.0
        %545 = vmatpush.xpose.msra.mxu0 0.0
        %546 = vmatpush.xpose.msra.mxu0 %v529
        %547 = vmatmul.f32.gmra.mxu0 %v527
        %v548 = vpop.f32.mrf.mxu0
        %v549 = vadd.f32 0.0, %v548
        %550 = vdwg.mxu0
        %v551 = vsel %vm355, %v549, -inf
        %552 = vmax.xlane.f32.xlu0 %v551
        %v553 = vpop.xlane.xlu0 %552
        %v554 = vsub.f32 %v549, %v553
        %v555 = vmul.f32 %v554, 1.442695
        %v556 = vpow.pop %v555
        %v557 = vsel %vm355, %v556, 0.0
        %558 = vadd.xlane.f32.xlu0 %v557
        %v559 = vpop.xlane.xlu0 %558
        %v560 = vrcp.pop %v559
        %v561 = vmul.f32 %v556, %v560
        %562 = vrot.lane.b32.xlu0 %v327, 16
        %v563 = vpop.permute.xlu0 %562
        %v566 = vsel %vm355, %v561, 0
        %568 = vmatpush.msra.mxu0 0.0
        %569 = vmatpush.msra.mxu0 0.0
        %570 = vmatpush.msra.mxu0 0.0
        %571 = vmatpush.msra.mxu0 0.0
        %572 = vmatpush.msra.mxu0 0.0
        %573 = vmatpush.msra.mxu0 0.0
        %574 = vmatpush.msra.mxu0 0.0
        %575 = vmatpush.msra.mxu0 0.0
        %576 = vmatpush.msra.mxu0 0.0
        %577 = vmatpush.msra.mxu0 0.0
        %578 = vmatpush.msra.mxu0 0.0
        %579 = vmatpush.msra.mxu0 0.0
        %580 = vmatpush.msra.mxu0 0.0
        %581 = vmatpush.msra.mxu0 0.0
        %582 = vmatpush.msra.mxu0 0.0
        %583 = vmatpush.msra.mxu0 %v563
        %584 = vmatmul.f32.gmra.mxu0 %v566
        %v585 = vpop.f32.mrf.mxu0
        %v586 = vadd.f32 0.0, %v585
        %587 = vdwg.mxu0
        %589 = vrot.lane.b32.xlu0 %v456, 16
        %v590 = vpop.permute.xlu0 %589
        %593 = vrot.lane.b32.xlu0 %v521, 32
        %v594 = vpop.permute.xlu0 %593
        %597 = vrot.lane.b32.xlu0 %v586, 48
        %v598 = vpop.permute.xlu0 %597
        %v600 = vsel %vm328, %v391, %v590
        %v601 = vsel %vm302, %v600, %v594
        %vm602 = vcmask 392192
        %v603 = vsel %vm602, %v601, %v598
        %v604 = vld [vmem:[#allocation3] sm:$0xff]
        %s605 = smul.u32 %s25, 64
        %s606 = scalar_lea.vmem %s2, %s605
        %v607 = vld [vmem:[%s606] sm:$0xff]
        %v608 = vld [vmem:[%s606 + $0x8] sm:$0xff]
        %v609 = vld [vmem:[%s606 + $0x10] sm:$0xff]
        %v610 = vld [vmem:[%s606 + $0x18] sm:$0xff]
        %v611 = vld [vmem:[%s606 + $0x20] sm:$0xff]
        %v612 = vld [vmem:[%s606 + $0x28] sm:$0xff]
        %v613 = vld [vmem:[%s606 + $0x30] sm:$0xff]
        %v614 = vld [vmem:[%s606 + $0x38] sm:$0xff]
        %vm615 = vcmask 523264
        %v617 = vsel %vm615, %v603, 0
        %619 = vmatpush.msra.mxu0 0.0
        %620 = vmatpush.msra.mxu0 0.0
        %621 = vmatpush.msra.mxu0 0.0
        %622 = vmatpush.msra.mxu0 0.0
        %623 = vmatpush.msra.mxu0 0.0
        %624 = vmatpush.msra.mxu0 0.0
        %625 = vmatpush.msra.mxu0 0.0
        %626 = vmatpush.msra.mxu0 0.0
        %627 = vmatpush.msra.mxu0 %v614
        %628 = vmatpush.msra.mxu0 %v613
        %629 = vmatpush.msra.mxu0 %v612
        %630 = vmatpush.msra.mxu0 %v611
        %631 = vmatpush.msra.mxu0 %v610
        %632 = vmatpush.msra.mxu0 %v609
        %633 = vmatpush.msra.mxu0 %v608
        %634 = vmatpush.msra.mxu0 %v607
        %635 = vmatmul.f32.gmra.mxu0 %v617
        %v636 = vpop.f32.mrf.mxu0
        %v637 = vadd.f32 0.0, %v636
        %638 = vdwg.mxu0
        %v639 = vadd.f32 %v604, %v637
        %640 = vst.msk [vmem:[#allocation3] sm:$0xff] %vm302, %v639
        // Predicated region
        $region45: #{tpu_custom_call.1} parent=35 // pred_check
          %p641 = pneg %p289
        $region46: #{tpu_custom_call.1} parent=35 // pred_check_branch
          %643 = sbr.rel (%p641) target = $region48
        $region47: #{tpu_custom_call.1} parent=35 // pred_region
          %v644 = vld [vmem:[#allocation3] sm:$0xff]
          %645 = vst.msk [vmem:[%s209] sm:$0xff] %vm302, %v644
        $region48: #{tpu_custom_call.1} parent=35 // pred_fallthru
          _
        %s646 = sand.u32 %s136, 1
        %s647 = scalar_lea.sflag [#allocation5], %s646
        %s648 = sand.u32 %s136, 1
        %s649 = smul.addr %s648, 8
        %s650 = scalar_lea.vmem [#allocation4], %s649
        // Predicated region
        $region49: #{tpu_custom_call.1} parent=35 // pred_check
          %p651 = pneg %p146
        $region50: #{tpu_custom_call.1} parent=35 // pred_check_branch
          %653 = sbr.rel (%p651) target = $region52
        $region51: #{tpu_custom_call.1} parent=35 // pred_region
          %655 = vsyncadd %s647, 0
          %s656 = sadd.s32 %s24, %s23
          %s657 = smul.addr %s656, 8
          %s658 = scalar_lea.hbm %s4, %s657
          %s660 = sshll.u32 %s650, 4
          %s661 = int_to_ptr.vmem [resolvable:$true] %s660
          %s662 = sshll.u32 %s658, 4
          %s663 = int_to_ptr.hbm [resolvable:$true] %s662
          %665 = dma.vmem_to_hbm [thread:$0]  %s661, 128, %s663, %s647
        $region52: #{tpu_custom_call.1} parent=35 // pred_fallthru
          _
      $region36: #{tpu_custom_call.1} parent=5 // pred_fallthru
        _
      %p666 = scmp.le.s32.totalorder 2, %s13
      // Predicated region
      $region53: #{tpu_custom_call.1} parent=5 // pred_check
        %p667 = pneg %p666
      $region54: #{tpu_custom_call.1} parent=5 // pred_check_branch
        %669 = sbr.rel (%p667) target = $region56
      $region55: #{tpu_custom_call.1} parent=5 // pred_region
        %s670 = ssub.s32 %s13, 2
        // Predicated region
        $region57: #{tpu_custom_call.1} parent=55 // pred_check
          %p671 = pneg %p152
        $region58: #{tpu_custom_call.1} parent=55 // pred_check_branch
          %673 = sbr.rel (%p671) target = $region60
        $region59: #{tpu_custom_call.1} parent=55 // pred_region
          %s674 = sand.u32 %s137, 1
          %s675 = scalar_lea.sflag [#allocation5], %s674
          %s676 = sand.u32 %s137, 1
          %s677 = smul.addr %s676, 8
          %s678 = scalar_lea.vmem [#allocation4], %s677
          %680 = dma.done %s675, 128
        $region60: #{tpu_custom_call.1} parent=55 // pred_fallthru
          _
      $region56: #{tpu_custom_call.1} parent=5 // pred_fallthru
        _
    $region6: #{tpu_custom_call.1} parent=1 // loop_footer
      %s17 = sadd.s32 1, %s13
    $region7: #{tpu_custom_call.1} parent=1 // loop_footer_branch
      %12 = sbr.rel target = $region3
    $region8: #{tpu_custom_call.1} parent=1 // loop_exit
      _
    %681 = vsyncpa [#allocation5], 1
    %s682 = scalar_lea.sflag [#allocation5], 1
    %683 = vsyncpa %s682, 1

</llo_original>
